<compile_context>
chip_gen: v5e
topology: v5e:2x2
jax: 0.10.0
libtpu: 0.0.40
codegen_flags: <defaults>
</compile_context>

<pallas_src>
from functools import partial

import jax
import jax.numpy as jnp
from jax.experimental import pallas as pl
from jax.experimental.pallas import tpu as pltpu


def _fused_bn_add_relu_conv_kernel(x56_ref, x49_ref, gb_ref, w_ref, o_ref,
                                   *, eps, inv_hw):
    # x56_ref, x49_ref : (C, HW)    activations, channels along sublanes
    # gb_ref           : (C, 2)     packed BatchNorm params [gamma | beta]
    # w_ref            : (Cout, C)  1x1 conv weight (stationary LHS)
    # o_ref            : (Cout, HW)
    x = x56_ref[...]                                        # (C, HW) f32

    # Single-pass training-mode batch stats over N*H*W (biased variance).
    s1 = jnp.sum(x, axis=1, keepdims=True)                  # (C, 1)
    s2 = jnp.sum(x * x, axis=1, keepdims=True)              # (C, 1)
    mean = s1 * inv_hw
    var = s2 * inv_hw - mean * mean

    gamma = gb_ref[:, 0:1]                                  # (C, 1)
    beta = gb_ref[:, 1:2]                                   # (C, 1)
    scale = gamma * jax.lax.rsqrt(var + eps)                # (C, 1)
    bias = beta - mean * scale                              # (C, 1)

    z = jnp.maximum(x49_ref[...] + x * scale + bias, 0.0)   # BN + add + ReLU

    # 1x1 conv == matmul on the MXU: (Cout, C) @ (C, HW) -> (Cout, HW)
    o_ref[...] = jnp.dot(w_ref[...], z,
                         preferred_element_type=jnp.float32).astype(o_ref.dtype)


def prepare_params(gamma, beta, conv_w):
    """One-time parameter packing (outside the per-call hot path)."""
    gb = jnp.stack([gamma, beta], axis=1)                   # (C, 2)
    w_mat = conv_w.reshape(conv_w.shape[0], conv_w.shape[1])  # (Cout, Cin), free
    return gb, w_mat


@jax.jit
def fused_forward(x56, x49, gb, w_mat, eps=1e-5):
    """x56, x49: (N, C, H, W) f32.  gb: (C, 2) packed [gamma|beta].
    w_mat: (Cout, Cin).  Returns (N, Cout, H, W)."""
    N, C, H, W = x56.shape
    Cout = w_mat.shape[0]
    HW = N * H * W

    # NCHW with N == 1 -> (C, H*W) is a pure reshape (no data movement).
    if N == 1:
        x56_2d = x56.reshape(C, HW)
        x49_2d = x49.reshape(C, HW)
    else:  # general fallback (not hit for this module's shapes)
        x56_2d = jnp.transpose(x56, (1, 0, 2, 3)).reshape(C, HW)
        x49_2d = jnp.transpose(x49, (1, 0, 2, 3)).reshape(C, HW)

    vmem_full = pl.BlockSpec(memory_space=pltpu.MemorySpace.VMEM)

    out_2d = pl.pallas_call(
        partial(_fused_bn_add_relu_conv_kernel, eps=eps, inv_hw=1.0 / HW),
        out_shape=jax.ShapeDtypeStruct((Cout, HW), jnp.float32),
        # No grid: single invocation, whole arrays resident in VMEM
        # (~0.5 MB total), no double-buffering / pipeline bookkeeping.
        in_specs=[vmem_full, vmem_full, vmem_full, vmem_full],
        out_specs=vmem_full,
    )(x56_2d, x49_2d, gb, w_mat)

    # (Cout, HW) -> (N, Cout, H, W): pure reshape for N == 1.
    if N == 1:
        return out_2d.reshape(1, Cout, H, W)
    return jnp.transpose(out_2d.reshape(Cout, N, H, W), (1, 0, 2, 3))


def reference_forward(x56, x49, gamma, beta, conv_w, eps=1e-5):
    mean = jnp.mean(x56, axis=(0, 2, 3), keepdims=True)
    var = jnp.mean((x56 - mean) ** 2, axis=(0, 2, 3), keepdims=True)
    bn = (x56 - mean) * jax.lax.rsqrt(var + eps) * gamma[None, :, None, None] \
         + beta[None, :, None, None]
    z = jnp.maximum(x49 + bn, 0.0)
    return jnp.einsum("oc,nchw->nohw", conv_w[:, :, 0, 0], z)


if __name__ == "__main__":
    # Shapes implied by the module: N=1, C=160, 14x14 spatial, 1x1 conv 160->160.
    N, C, H, W = 1, 160, 14, 14
    key = jax.random.PRNGKey(0)
    k1, k2, k3, k4, k5 = jax.random.split(key, 5)

    x56 = jax.random.normal(k1, (N, C, H, W), dtype=jnp.float32)
    x49 = jax.random.normal(k2, (N, C, H, W), dtype=jnp.float32)

    # Deterministic synthetic parameters
    gamma = 1.0 + 0.1 * jax.random.normal(k3, (C,), dtype=jnp.float32)
    beta = 0.1 * jax.random.normal(k4, (C,), dtype=jnp.float32)
    conv_w = (jax.random.normal(k5, (C, C, 1, 1), dtype=jnp.float32)
              * (1.0 / jnp.sqrt(C)))

    # One-time parameter packing (outside the jitted hot path).
    gb, w_mat = prepare_params(gamma, beta, conv_w)
    gb, w_mat = jax.block_until_ready((gb, w_mat))

    out = fused_forward(x56, x49, gb, w_mat)
    out = jax.block_until_ready(out)

    ref = reference_forward(x56, x49, gamma, beta, conv_w)
    assert out.shape == (N, C, H, W)
    assert jnp.allclose(out, ref, atol=1e-3, rtol=1e-3), "mismatch vs reference"

    # NOTE: the module's BatchNorm running_mean/var (momentum) buffer update is
    # a training-time side effect that does not affect the returned forward
    # value, so it is not emitted here.

    print("KERNEL_OK")
</pallas_src>

<mosaic_0001>
module attributes {stable_mosaic.version = 11 : i64} {
  func.func @_fused_bn_add_relu_conv_kernel(%arg0: memref<160x196xf32, #tpu.memory_space<vmem>>, %arg1: memref<160x196xf32, #tpu.memory_space<vmem>>, %arg2: memref<160x2xf32, #tpu.memory_space<vmem>>, %arg3: memref<160x160xf32, #tpu.memory_space<vmem>>, %arg4: memref<160x196xf32, #tpu.memory_space<vmem>>) attributes {dimension_semantics = [], scalar_prefetch = 0 : i64, scratch_operands = 0 : i64, tpu.core_type = #tpu.core_type<tc>} {
    %c0 = arith.constant 0 : index
    %c0_0 = arith.constant 0 : index
    %0 = vector.load %arg0[%c0, %c0_0] : memref<160x196xf32, #tpu.memory_space<vmem>>, vector<160x196xf32>
    %cst = arith.constant dense<0.000000e+00> : vector<160xf32>
    %1 = vector.multi_reduction <add>, %0, %cst [1] : vector<160x196xf32> to vector<160xf32>
    %2 = vector.shape_cast %1 : vector<160xf32> to vector<160x1xf32>
    %3 = arith.mulf %0, %0 : vector<160x196xf32>
    %cst_1 = arith.constant dense<0.000000e+00> : vector<160xf32>
    %4 = vector.multi_reduction <add>, %3, %cst_1 [1] : vector<160x196xf32> to vector<160xf32>
    %5 = vector.shape_cast %4 : vector<160xf32> to vector<160x1xf32>
    %cst_2 = arith.constant 0.00510204071 : f32
    %6 = vector.broadcast %cst_2 : f32 to vector<160x1xf32>
    %7 = arith.mulf %2, %6 : vector<160x1xf32>
    %cst_3 = arith.constant 0.00510204071 : f32
    %8 = vector.broadcast %cst_3 : f32 to vector<160x1xf32>
    %9 = arith.mulf %5, %8 : vector<160x1xf32>
    %10 = arith.mulf %7, %7 : vector<160x1xf32>
    %11 = arith.subf %9, %10 : vector<160x1xf32>
    %c0_4 = arith.constant 0 : index
    %c0_5 = arith.constant 0 : index
    %12 = vector.load %arg2[%c0_4, %c0_5] : memref<160x2xf32, #tpu.memory_space<vmem>>, vector<160x1xf32>
    %c0_6 = arith.constant 0 : index
    %c1 = arith.constant 1 : index
    %13 = vector.load %arg2[%c0_6, %c1] : memref<160x2xf32, #tpu.memory_space<vmem>>, vector<160x1xf32>
    %cst_7 = arith.constant 9.99999974E-6 : f32
    %14 = vector.broadcast %cst_7 : f32 to vector<160x1xf32>
    %15 = arith.addf %11, %14 : vector<160x1xf32>
    %16 = math.rsqrt %15 : vector<160x1xf32>
    %17 = arith.mulf %12, %16 : vector<160x1xf32>
    %18 = arith.mulf %7, %17 : vector<160x1xf32>
    %19 = arith.subf %13, %18 : vector<160x1xf32>
    %c0_8 = arith.constant 0 : index
    %c0_9 = arith.constant 0 : index
    %20 = vector.load %arg1[%c0_8, %c0_9] : memref<160x196xf32, #tpu.memory_space<vmem>>, vector<160x196xf32>
    %21 = vector.broadcast %17 : vector<160x1xf32> to vector<160x196xf32>
    %22 = arith.mulf %0, %21 : vector<160x196xf32>
    %23 = arith.addf %20, %22 : vector<160x196xf32>
    %24 = vector.broadcast %19 : vector<160x1xf32> to vector<160x196xf32>
    %25 = arith.addf %23, %24 : vector<160x196xf32>
    %cst_10 = arith.constant 0.000000e+00 : f32
    %26 = vector.broadcast %cst_10 : f32 to vector<160x196xf32>
    %27 = arith.maximumf %25, %26 : vector<160x196xf32>
    %c0_11 = arith.constant 0 : index
    %c0_12 = arith.constant 0 : index
    %28 = vector.load %arg3[%c0_11, %c0_12] : memref<160x160xf32, #tpu.memory_space<vmem>>, vector<160x160xf32>
    %cst_13 = arith.constant dense<0.000000e+00> : vector<160x196xf32>
    %29 = tpu.matmul %28, %27, %cst_13 {dimension_numbers = #tpu.dot_dimension_numbers<[1], [0], [0], [1], [0, 0, 1, 1], [], []>} : vector<160x160xf32>, vector<160x196xf32>, vector<160x196xf32> -> vector<160x196xf32>
    %c0_14 = arith.constant 0 : index
    %c0_15 = arith.constant 0 : index
    %30 = vector.load %arg4[%c0_14, %c0_15] : memref<160x196xf32, #tpu.memory_space<vmem>>, vector<160x196xf32>
    tpu.vector_store %arg4[%c0_14, %c0_15], %29 {strides = array<i32>} : memref<160x196xf32, #tpu.memory_space<vmem>>, vector<160x196xf32>,
    return
  }
}

</mosaic_0001>

<llo_original>
// kernel: fused_forward.1
$region0: #{fused_forward.1}
  #allocation0 [shape = 'u32[]', space=smem, size = 0x4, offset = 0x4, fixed_abs, tag = 'smem constant byte address 0x4 - core index']
  #allocation1 [shape = 'u32[72,128]{1,0:T(1,128)}', space=vmem, size = 0x9000, scoped, tag = 'internal scratch']
  %s0 = inlined_call_operand.vmem [shape: f32[160,196], index: 0, kind: input, shape index: {}]
  %s1 = inlined_call_operand.vmem [shape: f32[160,196], index: 1, kind: input, shape index: {}]
  %s2 = inlined_call_operand.vmem [shape: f32[160,2], index: 2, kind: input, shape index: {}]
  %s3 = inlined_call_operand.vmem [shape: f32[160,160], index: 3, kind: input, shape index: {}]
  %s4 = inlined_call_operand.vmem [shape: f32[160,196], index: 4, kind: output, shape index: {}]
  %s5 = sld [smem:[#allocation0]]
  $region26: #{fused_forward.1} parent=0
    _
  %s7 = ssub.s32 1, %s5
  %s8 = scalar_select 0, %s7, %s5
  // Predicated region
  $region2: #{fused_forward.1} parent=0 // pred_check
    _
  $region3: #{fused_forward.1} parent=0 // pred_check_branch
    %10 = sbr.rel (0) target = $region5
  $region4: #{fused_forward.1} parent=0 // pred_region
    _
  $region5: #{fused_forward.1} parent=0 // pred_fallthru
    _
  // Predicated region
  $region6: #{fused_forward.1} parent=0 // pred_check
    _
  $region7: #{fused_forward.1} parent=0 // pred_check_branch
    %12 = sbr.rel (0) target = $region9
  $region8: #{fused_forward.1} parent=0 // pred_region
    _
  $region9: #{fused_forward.1} parent=0 // pred_fallthru
    _
  // Predicated region
  $region10: #{fused_forward.1} parent=0 // pred_check
    _
  $region11: #{fused_forward.1} parent=0 // pred_check_branch
    %14 = sbr.rel (0) target = $region13
  $region12: #{fused_forward.1} parent=0 // pred_region
    _
  $region13: #{fused_forward.1} parent=0 // pred_fallthru
    _
  // Predicated region
  $region14: #{fused_forward.1} parent=0 // pred_check
    _
  $region15: #{fused_forward.1} parent=0 // pred_check_branch
    %16 = sbr.rel (0) target = $region17
  $region16: #{fused_forward.1} parent=0 // pred_region
    _
  $region17: #{fused_forward.1} parent=0 // pred_fallthru
    _
  %v17 = vld [vmem:[%s0] sm:$0xff]
  %v18 = vld [vmem:[%s0 + $0x8] sm:$0xff]
  %v19 = vld [vmem:[%s0 + $0x10] sm:$0xff]
  %v20 = vld [vmem:[%s0 + $0x18] sm:$0xff]
  %v21 = vld [vmem:[%s0 + $0x20] sm:$0xff]
  %v22 = vld [vmem:[%s0 + $0x28] sm:$0xff]
  %v23 = vld [vmem:[%s0 + $0x30] sm:$0xff]
  %v24 = vld [vmem:[%s0 + $0x38] sm:$0xff]
  %v25 = vld [vmem:[%s0 + $0x40] sm:$0xff]
  %v26 = vld [vmem:[%s0 + $0x48] sm:$0xff]
  %v27 = vld [vmem:[%s0 + $0x50] sm:$0xff]
  %v28 = vld [vmem:[%s0 + $0x58] sm:$0xff]
  %v29 = vld [vmem:[%s0 + $0x60] sm:$0xff]
  %v30 = vld [vmem:[%s0 + $0x68] sm:$0xff]
  %v31 = vld [vmem:[%s0 + $0x70] sm:$0xff]
  %v32 = vld [vmem:[%s0 + $0x78] sm:$0xff]
  %v33 = vld [vmem:[%s0 + $0x80] sm:$0xff]
  %v34 = vld [vmem:[%s0 + $0x88] sm:$0xff]
  %v35 = vld [vmem:[%s0 + $0x90] sm:$0xff]
  %v36 = vld [vmem:[%s0 + $0x98] sm:$0xff]
  %v37 = vld [vmem:[%s0 + $0xa0] sm:$0xff]
  %v38 = vld [vmem:[%s0 + $0xa8] sm:$0xff]
  %v39 = vld [vmem:[%s0 + $0xb0] sm:$0xff]
  %v40 = vld [vmem:[%s0 + $0xb8] sm:$0xff]
  %v41 = vld [vmem:[%s0 + $0xc0] sm:$0xff]
  %v42 = vld [vmem:[%s0 + $0xc8] sm:$0xff]
  %v43 = vld [vmem:[%s0 + $0xd0] sm:$0xff]
  %v44 = vld [vmem:[%s0 + $0xd8] sm:$0xff]
  %v45 = vld [vmem:[%s0 + $0xe0] sm:$0xff]
  %v46 = vld [vmem:[%s0 + $0xe8] sm:$0xff]
  %v47 = vld [vmem:[%s0 + $0xf0] sm:$0xff]
  %v48 = vld [vmem:[%s0 + $0xf8] sm:$0xff]
  %v49 = vld [vmem:[%s0 + $0x100] sm:$0xff]
  %v50 = vld [vmem:[%s0 + $0x108] sm:$0xff]
  %v51 = vld [vmem:[%s0 + $0x110] sm:$0xff]
  %v52 = vld [vmem:[%s0 + $0x118] sm:$0xff]
  %v53 = vld [vmem:[%s0 + $0x120] sm:$0xff]
  %v54 = vld [vmem:[%s0 + $0x128] sm:$0xff]
  %v55 = vld [vmem:[%s0 + $0x130] sm:$0xff]
  %v56 = vld [vmem:[%s0 + $0x138] sm:$0xff]
  %vm57 = vcmask 556032
  %v58 = vsel %vm57, %v18, 0.0
  %v59 = vadd.f32 %v17, %v58
  %60 = vadd.xlane.f32.xlu0 %v59
  %v61 = vpop.xlane.xlu0 %60
  %v62 = vsel %vm57, %v20, 0.0
  %v63 = vadd.f32 %v19, %v62
  %64 = vadd.xlane.f32.xlu0 %v63
  %v65 = vpop.xlane.xlu0 %64
  %v66 = vsel %vm57, %v22, 0.0
  %v67 = vadd.f32 %v21, %v66
  %68 = vadd.xlane.f32.xlu0 %v67
  %v69 = vpop.xlane.xlu0 %68
  %v70 = vsel %vm57, %v24, 0.0
  %v71 = vadd.f32 %v23, %v70
  %72 = vadd.xlane.f32.xlu0 %v71
  %v73 = vpop.xlane.xlu0 %72
  %v74 = vsel %vm57, %v26, 0.0
  %v75 = vadd.f32 %v25, %v74
  %76 = vadd.xlane.f32.xlu0 %v75
  %v77 = vpop.xlane.xlu0 %76
  %v78 = vsel %vm57, %v28, 0.0
  %v79 = vadd.f32 %v27, %v78
  %80 = vadd.xlane.f32.xlu0 %v79
  %v81 = vpop.xlane.xlu0 %80
  %v82 = vsel %vm57, %v30, 0.0
  %v83 = vadd.f32 %v29, %v82
  %84 = vadd.xlane.f32.xlu0 %v83
  %v85 = vpop.xlane.xlu0 %84
  %v86 = vsel %vm57, %v32, 0.0
  %v87 = vadd.f32 %v31, %v86
  %88 = vadd.xlane.f32.xlu0 %v87
  %v89 = vpop.xlane.xlu0 %88
  %v90 = vsel %vm57, %v34, 0.0
  %v91 = vadd.f32 %v33, %v90
  %92 = vadd.xlane.f32.xlu0 %v91
  %v93 = vpop.xlane.xlu0 %92
  %v94 = vsel %vm57, %v36, 0.0
  %v95 = vadd.f32 %v35, %v94
  %96 = vadd.xlane.f32.xlu0 %v95
  %v97 = vpop.xlane.xlu0 %96
  %v98 = vsel %vm57, %v38, 0.0
  %v99 = vadd.f32 %v37, %v98
  %100 = vadd.xlane.f32.xlu0 %v99
  %v101 = vpop.xlane.xlu0 %100
  %v102 = vsel %vm57, %v40, 0.0
  %v103 = vadd.f32 %v39, %v102
  %104 = vadd.xlane.f32.xlu0 %v103
  %v105 = vpop.xlane.xlu0 %104
  %v106 = vsel %vm57, %v42, 0.0
  %v107 = vadd.f32 %v41, %v106
  %108 = vadd.xlane.f32.xlu0 %v107
  %v109 = vpop.xlane.xlu0 %108
  %v110 = vsel %vm57, %v44, 0.0
  %v111 = vadd.f32 %v43, %v110
  %112 = vadd.xlane.f32.xlu0 %v111
  %v113 = vpop.xlane.xlu0 %112
  %v114 = vsel %vm57, %v46, 0.0
  %v115 = vadd.f32 %v45, %v114
  %116 = vadd.xlane.f32.xlu0 %v115
  %v117 = vpop.xlane.xlu0 %116
  %v118 = vsel %vm57, %v48, 0.0
  %v119 = vadd.f32 %v47, %v118
  %120 = vadd.xlane.f32.xlu0 %v119
  %v121 = vpop.xlane.xlu0 %120
  %v122 = vsel %vm57, %v50, 0.0
  %v123 = vadd.f32 %v49, %v122
  %124 = vadd.xlane.f32.xlu0 %v123
  %v125 = vpop.xlane.xlu0 %124
  %v126 = vsel %vm57, %v52, 0.0
  %v127 = vadd.f32 %v51, %v126
  %128 = vadd.xlane.f32.xlu0 %v127
  %v129 = vpop.xlane.xlu0 %128
  %v130 = vsel %vm57, %v54, 0.0
  %v131 = vadd.f32 %v53, %v130
  %132 = vadd.xlane.f32.xlu0 %v131
  %v133 = vpop.xlane.xlu0 %132
  %v134 = vsel %vm57, %v56, 0.0
  %v135 = vadd.f32 %v55, %v134
  %136 = vadd.xlane.f32.xlu0 %v135
  %v137 = vpop.xlane.xlu0 %136
  %v138 = vmul.f32 %v17, %v17
  %v139 = vmul.f32 %v18, %v18
  %v140 = vmul.f32 %v19, %v19
  %v141 = vmul.f32 %v20, %v20
  %v142 = vmul.f32 %v21, %v21
  %v143 = vmul.f32 %v22, %v22
  %v144 = vmul.f32 %v23, %v23
  %v145 = vmul.f32 %v24, %v24
  %v146 = vmul.f32 %v25, %v25
  %v147 = vmul.f32 %v26, %v26
  %v148 = vmul.f32 %v27, %v27
  %v149 = vmul.f32 %v28, %v28
  %v150 = vmul.f32 %v29, %v29
  %v151 = vmul.f32 %v30, %v30
  %v152 = vmul.f32 %v31, %v31
  %v153 = vmul.f32 %v32, %v32
  %v154 = vmul.f32 %v33, %v33
  %v155 = vmul.f32 %v34, %v34
  %v156 = vmul.f32 %v35, %v35
  %v157 = vmul.f32 %v36, %v36
  %v158 = vmul.f32 %v37, %v37
  %v159 = vmul.f32 %v38, %v38
  %v160 = vmul.f32 %v39, %v39
  %v161 = vmul.f32 %v40, %v40
  %v162 = vmul.f32 %v41, %v41
  %v163 = vmul.f32 %v42, %v42
  %v164 = vmul.f32 %v43, %v43
  %v165 = vmul.f32 %v44, %v44
  %v166 = vmul.f32 %v45, %v45
  %v167 = vmul.f32 %v46, %v46
  %v168 = vmul.f32 %v47, %v47
  %v169 = vmul.f32 %v48, %v48
  %v170 = vmul.f32 %v49, %v49
  %v171 = vmul.f32 %v50, %v50
  %v172 = vmul.f32 %v51, %v51
  %v173 = vmul.f32 %v52, %v52
  %v174 = vmul.f32 %v53, %v53
  %v175 = vmul.f32 %v54, %v54
  %v176 = vmul.f32 %v55, %v55
  %v177 = vmul.f32 %v56, %v56
  %v178 = vsel %vm57, %v139, 0.0
  %v179 = vadd.f32 %v138, %v178
  %180 = vadd.xlane.f32.xlu0 %v179
  %v181 = vpop.xlane.xlu0 %180
  %v182 = vsel %vm57, %v141, 0.0
  %v183 = vadd.f32 %v140, %v182
  %184 = vadd.xlane.f32.xlu0 %v183
  %v185 = vpop.xlane.xlu0 %184
  %v186 = vsel %vm57, %v143, 0.0
  %v187 = vadd.f32 %v142, %v186
  %188 = vadd.xlane.f32.xlu0 %v187
  %v189 = vpop.xlane.xlu0 %188
  %v190 = vsel %vm57, %v145, 0.0
  %v191 = vadd.f32 %v144, %v190
  %192 = vadd.xlane.f32.xlu0 %v191
  %v193 = vpop.xlane.xlu0 %192
  %v194 = vsel %vm57, %v147, 0.0
  %v195 = vadd.f32 %v146, %v194
  %196 = vadd.xlane.f32.xlu0 %v195
  %v197 = vpop.xlane.xlu0 %196
  %v198 = vsel %vm57, %v149, 0.0
  %v199 = vadd.f32 %v148, %v198
  %200 = vadd.xlane.f32.xlu0 %v199
  %v201 = vpop.xlane.xlu0 %200
  %v202 = vsel %vm57, %v151, 0.0
  %v203 = vadd.f32 %v150, %v202
  %204 = vadd.xlane.f32.xlu0 %v203
  %v205 = vpop.xlane.xlu0 %204
  %v206 = vsel %vm57, %v153, 0.0
  %v207 = vadd.f32 %v152, %v206
  %208 = vadd.xlane.f32.xlu0 %v207
  %v209 = vpop.xlane.xlu0 %208
  %v210 = vsel %vm57, %v155, 0.0
  %v211 = vadd.f32 %v154, %v210
  %212 = vadd.xlane.f32.xlu0 %v211
  %v213 = vpop.xlane.xlu0 %212
  %v214 = vsel %vm57, %v157, 0.0
  %v215 = vadd.f32 %v156, %v214
  %216 = vadd.xlane.f32.xlu0 %v215
  %v217 = vpop.xlane.xlu0 %216
  %v218 = vsel %vm57, %v159, 0.0
  %v219 = vadd.f32 %v158, %v218
  %220 = vadd.xlane.f32.xlu0 %v219
  %v221 = vpop.xlane.xlu0 %220
  %v222 = vsel %vm57, %v161, 0.0
  %v223 = vadd.f32 %v160, %v222
  %224 = vadd.xlane.f32.xlu0 %v223
  %v225 = vpop.xlane.xlu0 %224
  %v226 = vsel %vm57, %v163, 0.0
  %v227 = vadd.f32 %v162, %v226
  %228 = vadd.xlane.f32.xlu0 %v227
  %v229 = vpop.xlane.xlu0 %228
  %v230 = vsel %vm57, %v165, 0.0
  %v231 = vadd.f32 %v164, %v230
  %232 = vadd.xlane.f32.xlu0 %v231
  %v233 = vpop.xlane.xlu0 %232
  %v234 = vsel %vm57, %v167, 0.0
  %v235 = vadd.f32 %v166, %v234
  %236 = vadd.xlane.f32.xlu0 %v235
  %v237 = vpop.xlane.xlu0 %236
  %v238 = vsel %vm57, %v169, 0.0
  %v239 = vadd.f32 %v168, %v238
  %240 = vadd.xlane.f32.xlu0 %v239
  %v241 = vpop.xlane.xlu0 %240
  %v242 = vsel %vm57, %v171, 0.0
  %v243 = vadd.f32 %v170, %v242
  %244 = vadd.xlane.f32.xlu0 %v243
  %v245 = vpop.xlane.xlu0 %244
  %v246 = vsel %vm57, %v173, 0.0
  %v247 = vadd.f32 %v172, %v246
  %248 = vadd.xlane.f32.xlu0 %v247
  %v249 = vpop.xlane.xlu0 %248
  %v250 = vsel %vm57, %v175, 0.0
  %v251 = vadd.f32 %v174, %v250
  %252 = vadd.xlane.f32.xlu0 %v251
  %v253 = vpop.xlane.xlu0 %252
  %v254 = vsel %vm57, %v177, 0.0
  %v255 = vadd.f32 %v176, %v254
  %256 = vadd.xlane.f32.xlu0 %v255
  %v257 = vpop.xlane.xlu0 %256
  %v258 = vmul.f32 %v61, 0.0051020407
  %v259 = vmul.f32 %v65, 0.0051020407
  %v260 = vmul.f32 %v69, 0.0051020407
  %v261 = vmul.f32 %v73, 0.0051020407
  %v262 = vmul.f32 %v77, 0.0051020407
  %v263 = vmul.f32 %v81, 0.0051020407
  %v264 = vmul.f32 %v85, 0.0051020407
  %v265 = vmul.f32 %v89, 0.0051020407
  %v266 = vmul.f32 %v93, 0.0051020407
  %v267 = vmul.f32 %v97, 0.0051020407
  %v268 = vmul.f32 %v101, 0.0051020407
  %v269 = vmul.f32 %v105, 0.0051020407
  %v270 = vmul.f32 %v109, 0.0051020407
  %v271 = vmul.f32 %v113, 0.0051020407
  %v272 = vmul.f32 %v117, 0.0051020407
  %v273 = vmul.f32 %v121, 0.0051020407
  %v274 = vmul.f32 %v125, 0.0051020407
  %v275 = vmul.f32 %v129, 0.0051020407
  %v276 = vmul.f32 %v133, 0.0051020407
  %v277 = vmul.f32 %v137, 0.0051020407
  %v278 = vmul.f32 %v181, 0.0051020407
  %v279 = vmul.f32 %v185, 0.0051020407
  %v280 = vmul.f32 %v189, 0.0051020407
  %v281 = vmul.f32 %v193, 0.0051020407
  %v282 = vmul.f32 %v197, 0.0051020407
  %v283 = vmul.f32 %v201, 0.0051020407
  %v284 = vmul.f32 %v205, 0.0051020407
  %v285 = vmul.f32 %v209, 0.0051020407
  %v286 = vmul.f32 %v213, 0.0051020407
  %v287 = vmul.f32 %v217, 0.0051020407
  %v288 = vmul.f32 %v221, 0.0051020407
  %v289 = vmul.f32 %v225, 0.0051020407
  %v290 = vmul.f32 %v229, 0.0051020407
  %v291 = vmul.f32 %v233, 0.0051020407
  %v292 = vmul.f32 %v237, 0.0051020407
  %v293 = vmul.f32 %v241, 0.0051020407
  %v294 = vmul.f32 %v245, 0.0051020407
  %v295 = vmul.f32 %v249, 0.0051020407
  %v296 = vmul.f32 %v253, 0.0051020407
  %v297 = vmul.f32 %v257, 0.0051020407
  %v298 = vmul.f32 %v258, %v258
  %v299 = vmul.f32 %v259, %v259
  %v300 = vmul.f32 %v260, %v260
  %v301 = vmul.f32 %v261, %v261
  %v302 = vmul.f32 %v262, %v262
  %v303 = vmul.f32 %v263, %v263
  %v304 = vmul.f32 %v264, %v264
  %v305 = vmul.f32 %v265, %v265
  %v306 = vmul.f32 %v266, %v266
  %v307 = vmul.f32 %v267, %v267
  %v308 = vmul.f32 %v268, %v268
  %v309 = vmul.f32 %v269, %v269
  %v310 = vmul.f32 %v270, %v270
  %v311 = vmul.f32 %v271, %v271
  %v312 = vmul.f32 %v272, %v272
  %v313 = vmul.f32 %v273, %v273
  %v314 = vmul.f32 %v274, %v274
  %v315 = vmul.f32 %v275, %v275
  %v316 = vmul.f32 %v276, %v276
  %v317 = vmul.f32 %v277, %v277
  %v318 = vsub.f32 %v278, %v298
  %v319 = vsub.f32 %v279, %v299
  %v320 = vsub.f32 %v280, %v300
  %v321 = vsub.f32 %v281, %v301
  %v322 = vsub.f32 %v282, %v302
  %v323 = vsub.f32 %v283, %v303
  %v324 = vsub.f32 %v284, %v304
  %v325 = vsub.f32 %v285, %v305
  %v326 = vsub.f32 %v286, %v306
  %v327 = vsub.f32 %v287, %v307
  %v328 = vsub.f32 %v288, %v308
  %v329 = vsub.f32 %v289, %v309
  %v330 = vsub.f32 %v290, %v310
  %v331 = vsub.f32 %v291, %v311
  %v332 = vsub.f32 %v292, %v312
  %v333 = vsub.f32 %v293, %v313
  %v334 = vsub.f32 %v294, %v314
  %v335 = vsub.f32 %v295, %v315
  %v336 = vsub.f32 %v296, %v316
  %v337 = vsub.f32 %v297, %v317
  %v338 = vld [vmem:[%s2] sm:$0xff]
  %v339 = vld [vmem:[%s2 + $0x8] sm:$0xff]
  %v340 = vld [vmem:[%s2 + $0x10] sm:$0xff]
  %v341 = vld [vmem:[%s2 + $0x18] sm:$0xff]
  %v342 = vld [vmem:[%s2 + $0x20] sm:$0xff]
  %v343 = vld [vmem:[%s2 + $0x28] sm:$0xff]
  %v344 = vld [vmem:[%s2 + $0x30] sm:$0xff]
  %v345 = vld [vmem:[%s2 + $0x38] sm:$0xff]
  %v346 = vld [vmem:[%s2 + $0x40] sm:$0xff]
  %v347 = vld [vmem:[%s2 + $0x48] sm:$0xff]
  %v348 = vld [vmem:[%s2 + $0x50] sm:$0xff]
  %v349 = vld [vmem:[%s2 + $0x58] sm:$0xff]
  %v350 = vld [vmem:[%s2 + $0x60] sm:$0xff]
  %v351 = vld [vmem:[%s2 + $0x68] sm:$0xff]
  %v352 = vld [vmem:[%s2 + $0x70] sm:$0xff]
  %v353 = vld [vmem:[%s2 + $0x78] sm:$0xff]
  %v354 = vld [vmem:[%s2 + $0x80] sm:$0xff]
  %v355 = vld [vmem:[%s2 + $0x88] sm:$0xff]
  %v356 = vld [vmem:[%s2 + $0x90] sm:$0xff]
  %v357 = vld [vmem:[%s2 + $0x98] sm:$0xff]
  %v358 = vadd.f32 %v318, 1e-05
  %v359 = vadd.f32 %v319, 1e-05
  %v360 = vadd.f32 %v320, 1e-05
  %v361 = vadd.f32 %v321, 1e-05
  %v362 = vadd.f32 %v322, 1e-05
  %v363 = vadd.f32 %v323, 1e-05
  %v364 = vadd.f32 %v324, 1e-05
  %v365 = vadd.f32 %v325, 1e-05
  %v366 = vadd.f32 %v326, 1e-05
  %v367 = vadd.f32 %v327, 1e-05
  %v368 = vadd.f32 %v328, 1e-05
  %v369 = vadd.f32 %v329, 1e-05
  %v370 = vadd.f32 %v330, 1e-05
  %v371 = vadd.f32 %v331, 1e-05
  %v372 = vadd.f32 %v332, 1e-05
  %v373 = vadd.f32 %v333, 1e-05
  %v374 = vadd.f32 %v334, 1e-05
  %v375 = vadd.f32 %v335, 1e-05
  %v376 = vadd.f32 %v336, 1e-05
  %v377 = vadd.f32 %v337, 1e-05
  %v378 = vrsqrt.pop %v358
  %v379 = vmul.f32 %v378, %v358
  %v380 = vmul.f32 %v379, %v378
  %v381 = vmul.f32 0.5, %v380
  %v382 = vsub.f32 1.5, %v381
  %v383 = vmul.f32 %v378, %v382
  %vm384 = vweird.f32 %v358
  %vm385 = vweird.f32 %v378
  %vm386 = vmor %vm384, %vm385
  %v387 = vsel %vm386, %v378, %v383
  %v388 = vrsqrt.pop %v359
  %v389 = vmul.f32 %v388, %v359
  %v390 = vmul.f32 %v389, %v388
  %v391 = vmul.f32 0.5, %v390
  %v392 = vsub.f32 1.5, %v391
  %v393 = vmul.f32 %v388, %v392
  %vm394 = vweird.f32 %v359
  %vm395 = vweird.f32 %v388
  %vm396 = vmor %vm394, %vm395
  %v397 = vsel %vm396, %v388, %v393
  %v398 = vrsqrt.pop %v360
  %v399 = vmul.f32 %v398, %v360
  %v400 = vmul.f32 %v399, %v398
  %v401 = vmul.f32 0.5, %v400
  %v402 = vsub.f32 1.5, %v401
  %v403 = vmul.f32 %v398, %v402
  %vm404 = vweird.f32 %v360
  %vm405 = vweird.f32 %v398
  %vm406 = vmor %vm404, %vm405
  %v407 = vsel %vm406, %v398, %v403
  %v408 = vrsqrt.pop %v361
  %v409 = vmul.f32 %v408, %v361
  %v410 = vmul.f32 %v409, %v408
  %v411 = vmul.f32 0.5, %v410
  %v412 = vsub.f32 1.5, %v411
  %v413 = vmul.f32 %v408, %v412
  %vm414 = vweird.f32 %v361
  %vm415 = vweird.f32 %v408
  %vm416 = vmor %vm414, %vm415
  %v417 = vsel %vm416, %v408, %v413
  %v418 = vrsqrt.pop %v362
  %v419 = vmul.f32 %v418, %v362
  %v420 = vmul.f32 %v419, %v418
  %v421 = vmul.f32 0.5, %v420
  %v422 = vsub.f32 1.5, %v421
  %v423 = vmul.f32 %v418, %v422
  %vm424 = vweird.f32 %v362
  %vm425 = vweird.f32 %v418
  %vm426 = vmor %vm424, %vm425
  %v427 = vsel %vm426, %v418, %v423
  %v428 = vrsqrt.pop %v363
  %v429 = vmul.f32 %v428, %v363
  %v430 = vmul.f32 %v429, %v428
  %v431 = vmul.f32 0.5, %v430
  %v432 = vsub.f32 1.5, %v431
  %v433 = vmul.f32 %v428, %v432
  %vm434 = vweird.f32 %v363
  %vm435 = vweird.f32 %v428
  %vm436 = vmor %vm434, %vm435
  %v437 = vsel %vm436, %v428, %v433
  %v438 = vrsqrt.pop %v364
  %v439 = vmul.f32 %v438, %v364
  %v440 = vmul.f32 %v439, %v438
  %v441 = vmul.f32 0.5, %v440
  %v442 = vsub.f32 1.5, %v441
  %v443 = vmul.f32 %v438, %v442
  %vm444 = vweird.f32 %v364
  %vm445 = vweird.f32 %v438
  %vm446 = vmor %vm444, %vm445
  %v447 = vsel %vm446, %v438, %v443
  %v448 = vrsqrt.pop %v365
  %v449 = vmul.f32 %v448, %v365
  %v450 = vmul.f32 %v449, %v448
  %v451 = vmul.f32 0.5, %v450
  %v452 = vsub.f32 1.5, %v451
  %v453 = vmul.f32 %v448, %v452
  %vm454 = vweird.f32 %v365
  %vm455 = vweird.f32 %v448
  %vm456 = vmor %vm454, %vm455
  %v457 = vsel %vm456, %v448, %v453
  %v458 = vrsqrt.pop %v366
  %v459 = vmul.f32 %v458, %v366
  %v460 = vmul.f32 %v459, %v458
  %v461 = vmul.f32 0.5, %v460
  %v462 = vsub.f32 1.5, %v461
  %v463 = vmul.f32 %v458, %v462
  %vm464 = vweird.f32 %v366
  %vm465 = vweird.f32 %v458
  %vm466 = vmor %vm464, %vm465
  %v467 = vsel %vm466, %v458, %v463
  %v468 = vrsqrt.pop %v367
  %v469 = vmul.f32 %v468, %v367
  %v470 = vmul.f32 %v469, %v468
  %v471 = vmul.f32 0.5, %v470
  %v472 = vsub.f32 1.5, %v471
  %v473 = vmul.f32 %v468, %v472
  %vm474 = vweird.f32 %v367
  %vm475 = vweird.f32 %v468
  %vm476 = vmor %vm474, %vm475
  %v477 = vsel %vm476, %v468, %v473
  %v478 = vrsqrt.pop %v368
  %v479 = vmul.f32 %v478, %v368
  %v480 = vmul.f32 %v479, %v478
  %v481 = vmul.f32 0.5, %v480
  %v482 = vsub.f32 1.5, %v481
  %v483 = vmul.f32 %v478, %v482
  %vm484 = vweird.f32 %v368
  %vm485 = vweird.f32 %v478
  %vm486 = vmor %vm484, %vm485
  %v487 = vsel %vm486, %v478, %v483
  %v488 = vrsqrt.pop %v369
  %v489 = vmul.f32 %v488, %v369
  %v490 = vmul.f32 %v489, %v488
  %v491 = vmul.f32 0.5, %v490
  %v492 = vsub.f32 1.5, %v491
  %v493 = vmul.f32 %v488, %v492
  %vm494 = vweird.f32 %v369
  %vm495 = vweird.f32 %v488
  %vm496 = vmor %vm494, %vm495
  %v497 = vsel %vm496, %v488, %v493
  %v498 = vrsqrt.pop %v370
  %v499 = vmul.f32 %v498, %v370
  %v500 = vmul.f32 %v499, %v498
  %v501 = vmul.f32 0.5, %v500
  %v502 = vsub.f32 1.5, %v501
  %v503 = vmul.f32 %v498, %v502
  %vm504 = vweird.f32 %v370
  %vm505 = vweird.f32 %v498
  %vm506 = vmor %vm504, %vm505
  %v507 = vsel %vm506, %v498, %v503
  %v508 = vrsqrt.pop %v371
  %v509 = vmul.f32 %v508, %v371
  %v510 = vmul.f32 %v509, %v508
  %v511 = vmul.f32 0.5, %v510
  %v512 = vsub.f32 1.5, %v511
  %v513 = vmul.f32 %v508, %v512
  %vm514 = vweird.f32 %v371
  %vm515 = vweird.f32 %v508
  %vm516 = vmor %vm514, %vm515
  %v517 = vsel %vm516, %v508, %v513
  %v518 = vrsqrt.pop %v372
  %v519 = vmul.f32 %v518, %v372
  %v520 = vmul.f32 %v519, %v518
  %v521 = vmul.f32 0.5, %v520
  %v522 = vsub.f32 1.5, %v521
  %v523 = vmul.f32 %v518, %v522
  %vm524 = vweird.f32 %v372
  %vm525 = vweird.f32 %v518
  %vm526 = vmor %vm524, %vm525
  %v527 = vsel %vm526, %v518, %v523
  %v528 = vrsqrt.pop %v373
  %v529 = vmul.f32 %v528, %v373
  %v530 = vmul.f32 %v529, %v528
  %v531 = vmul.f32 0.5, %v530
  %v532 = vsub.f32 1.5, %v531
  %v533 = vmul.f32 %v528, %v532
  %vm534 = vweird.f32 %v373
  %vm535 = vweird.f32 %v528
  %vm536 = vmor %vm534, %vm535
  %v537 = vsel %vm536, %v528, %v533
  %v538 = vrsqrt.pop %v374
  %v539 = vmul.f32 %v538, %v374
  %v540 = vmul.f32 %v539, %v538
  %v541 = vmul.f32 0.5, %v540
  %v542 = vsub.f32 1.5, %v541
  %v543 = vmul.f32 %v538, %v542
  %vm544 = vweird.f32 %v374
  %vm545 = vweird.f32 %v538
  %vm546 = vmor %vm544, %vm545
  %v547 = vsel %vm546, %v538, %v543
  %v548 = vrsqrt.pop %v375
  %v549 = vmul.f32 %v548, %v375
  %v550 = vmul.f32 %v549, %v548
  %v551 = vmul.f32 0.5, %v550
  %v552 = vsub.f32 1.5, %v551
  %v553 = vmul.f32 %v548, %v552
  %vm554 = vweird.f32 %v375
  %vm555 = vweird.f32 %v548
  %vm556 = vmor %vm554, %vm555
  %v557 = vsel %vm556, %v548, %v553
  %v558 = vrsqrt.pop %v376
  %v559 = vmul.f32 %v558, %v376
  %v560 = vmul.f32 %v559, %v558
  %v561 = vmul.f32 0.5, %v560
  %v562 = vsub.f32 1.5, %v561
  %v563 = vmul.f32 %v558, %v562
  %vm564 = vweird.f32 %v376
  %vm565 = vweird.f32 %v558
  %vm566 = vmor %vm564, %vm565
  %v567 = vsel %vm566, %v558, %v563
  %v568 = vrsqrt.pop %v377
  %v569 = vmul.f32 %v568, %v377
  %v570 = vmul.f32 %v569, %v568
  %v571 = vmul.f32 0.5, %v570
  %v572 = vsub.f32 1.5, %v571
  %v573 = vmul.f32 %v568, %v572
  %vm574 = vweird.f32 %v377
  %vm575 = vweird.f32 %v568
  %vm576 = vmor %vm574, %vm575
  %v577 = vsel %vm576, %v568, %v573
  %v578 = vmul.f32 %v338, %v387
  %v579 = vmul.f32 %v339, %v397
  %v580 = vmul.f32 %v340, %v407
  %v581 = vmul.f32 %v341, %v417
  %v582 = vmul.f32 %v342, %v427
  %v583 = vmul.f32 %v343, %v437
  %v584 = vmul.f32 %v344, %v447
  %v585 = vmul.f32 %v345, %v457
  %v586 = vmul.f32 %v346, %v467
  %v587 = vmul.f32 %v347, %v477
  %v588 = vmul.f32 %v348, %v487
  %v589 = vmul.f32 %v349, %v497
  %v590 = vmul.f32 %v350, %v507
  %v591 = vmul.f32 %v351, %v517
  %v592 = vmul.f32 %v352, %v527
  %v593 = vmul.f32 %v353, %v537
  %v594 = vmul.f32 %v354, %v547
  %v595 = vmul.f32 %v355, %v557
  %v596 = vmul.f32 %v356, %v567
  %v597 = vmul.f32 %v357, %v577
  %v598 = vmul.f32 %v258, %v578
  %v599 = vmul.f32 %v259, %v579
  %v600 = vmul.f32 %v260, %v580
  %v601 = vmul.f32 %v261, %v581
  %v602 = vmul.f32 %v262, %v582
  %v603 = vmul.f32 %v263, %v583
  %v604 = vmul.f32 %v264, %v584
  %v605 = vmul.f32 %v265, %v585
  %v606 = vmul.f32 %v266, %v586
  %v607 = vmul.f32 %v267, %v587
  %v608 = vmul.f32 %v268, %v588
  %v609 = vmul.f32 %v269, %v589
  %v610 = vmul.f32 %v270, %v590
  %v611 = vmul.f32 %v271, %v591
  %v612 = vmul.f32 %v272, %v592
  %v613 = vmul.f32 %v273, %v593
  %v614 = vmul.f32 %v274, %v594
  %v615 = vmul.f32 %v275, %v595
  %v616 = vmul.f32 %v276, %v596
  %v617 = vmul.f32 %v277, %v597
  %638 = vrot.lane.b32.xlu0 %v598, 1
  %v639 = vpop.permute.xlu0 %638
  %640 = vrot.lane.b32.xlu0 %v599, 1
  %v641 = vpop.permute.xlu0 %640
  %642 = vrot.lane.b32.xlu0 %v600, 1
  %v643 = vpop.permute.xlu0 %642
  %644 = vrot.lane.b32.xlu0 %v601, 1
  %v645 = vpop.permute.xlu0 %644
  %646 = vrot.lane.b32.xlu0 %v602, 1
  %v647 = vpop.permute.xlu0 %646
  %648 = vrot.lane.b32.xlu0 %v603, 1
  %v649 = vpop.permute.xlu0 %648
  %650 = vrot.lane.b32.xlu0 %v604, 1
  %v651 = vpop.permute.xlu0 %650
  %652 = vrot.lane.b32.xlu0 %v605, 1
  %v653 = vpop.permute.xlu0 %652
  %654 = vrot.lane.b32.xlu0 %v606, 1
  %v655 = vpop.permute.xlu0 %654
  %656 = vrot.lane.b32.xlu0 %v607, 1
  %v657 = vpop.permute.xlu0 %656
  %658 = vrot.lane.b32.xlu0 %v608, 1
  %v659 = vpop.permute.xlu0 %658
  %660 = vrot.lane.b32.xlu0 %v609, 1
  %v661 = vpop.permute.xlu0 %660
  %662 = vrot.lane.b32.xlu0 %v610, 1
  %v663 = vpop.permute.xlu0 %662
  %664 = vrot.lane.b32.xlu0 %v611, 1
  %v665 = vpop.permute.xlu0 %664
  %666 = vrot.lane.b32.xlu0 %v612, 1
  %v667 = vpop.permute.xlu0 %666
  %668 = vrot.lane.b32.xlu0 %v613, 1
  %v669 = vpop.permute.xlu0 %668
  %670 = vrot.lane.b32.xlu0 %v614, 1
  %v671 = vpop.permute.xlu0 %670
  %672 = vrot.lane.b32.xlu0 %v615, 1
  %v673 = vpop.permute.xlu0 %672
  %674 = vrot.lane.b32.xlu0 %v616, 1
  %v675 = vpop.permute.xlu0 %674
  %676 = vrot.lane.b32.xlu0 %v617, 1
  %v677 = vpop.permute.xlu0 %676
  %v698 = vsub.f32 %v338, %v639
  %v699 = vsub.f32 %v339, %v641
  %v700 = vsub.f32 %v340, %v643
  %v701 = vsub.f32 %v341, %v645
  %v702 = vsub.f32 %v342, %v647
  %v703 = vsub.f32 %v343, %v649
  %v704 = vsub.f32 %v344, %v651
  %v705 = vsub.f32 %v345, %v653
  %v706 = vsub.f32 %v346, %v655
  %v707 = vsub.f32 %v347, %v657
  %v708 = vsub.f32 %v348, %v659
  %v709 = vsub.f32 %v349, %v661
  %v710 = vsub.f32 %v350, %v663
  %v711 = vsub.f32 %v351, %v665
  %v712 = vsub.f32 %v352, %v667
  %v713 = vsub.f32 %v353, %v669
  %v714 = vsub.f32 %v354, %v671
  %v715 = vsub.f32 %v355, %v673
  %v716 = vsub.f32 %v356, %v675
  %v717 = vsub.f32 %v357, %v677
  %v718 = vld [vmem:[%s1] sm:$0xff]
  %v719 = vld [vmem:[%s1 + $0x8] sm:$0xff]
  %v720 = vld [vmem:[%s1 + $0x10] sm:$0xff]
  %v721 = vld [vmem:[%s1 + $0x18] sm:$0xff]
  %v722 = vld [vmem:[%s1 + $0x20] sm:$0xff]
  %v723 = vld [vmem:[%s1 + $0x28] sm:$0xff]
  %v724 = vld [vmem:[%s1 + $0x30] sm:$0xff]
  %v725 = vld [vmem:[%s1 + $0x38] sm:$0xff]
  %v726 = vld [vmem:[%s1 + $0x40] sm:$0xff]
  %v727 = vld [vmem:[%s1 + $0x48] sm:$0xff]
  %v728 = vld [vmem:[%s1 + $0x50] sm:$0xff]
  %v729 = vld [vmem:[%s1 + $0x58] sm:$0xff]
  %v730 = vld [vmem:[%s1 + $0x60] sm:$0xff]
  %v731 = vld [vmem:[%s1 + $0x68] sm:$0xff]
  %v732 = vld [vmem:[%s1 + $0x70] sm:$0xff]
  %v733 = vld [vmem:[%s1 + $0x78] sm:$0xff]
  %v734 = vld [vmem:[%s1 + $0x80] sm:$0xff]
  %v735 = vld [vmem:[%s1 + $0x88] sm:$0xff]
  %v736 = vld [vmem:[%s1 + $0x90] sm:$0xff]
  %v737 = vld [vmem:[%s1 + $0x98] sm:$0xff]
  %v738 = vld [vmem:[%s1 + $0xa0] sm:$0xff]
  %v739 = vld [vmem:[%s1 + $0xa8] sm:$0xff]
  %v740 = vld [vmem:[%s1 + $0xb0] sm:$0xff]
  %v741 = vld [vmem:[%s1 + $0xb8] sm:$0xff]
  %v742 = vld [vmem:[%s1 + $0xc0] sm:$0xff]
  %v743 = vld [vmem:[%s1 + $0xc8] sm:$0xff]
  %v744 = vld [vmem:[%s1 + $0xd0] sm:$0xff]
  %v745 = vld [vmem:[%s1 + $0xd8] sm:$0xff]
  %v746 = vld [vmem:[%s1 + $0xe0] sm:$0xff]
  %v747 = vld [vmem:[%s1 + $0xe8] sm:$0xff]
  %v748 = vld [vmem:[%s1 + $0xf0] sm:$0xff]
  %v749 = vld [vmem:[%s1 + $0xf8] sm:$0xff]
  %v750 = vld [vmem:[%s1 + $0x100] sm:$0xff]
  %v751 = vld [vmem:[%s1 + $0x108] sm:$0xff]
  %v752 = vld [vmem:[%s1 + $0x110] sm:$0xff]
  %v753 = vld [vmem:[%s1 + $0x118] sm:$0xff]
  %v754 = vld [vmem:[%s1 + $0x120] sm:$0xff]
  %v755 = vld [vmem:[%s1 + $0x128] sm:$0xff]
  %v756 = vld [vmem:[%s1 + $0x130] sm:$0xff]
  %v757 = vld [vmem:[%s1 + $0x138] sm:$0xff]
  %759 = vset.pattern.permute.xlu0 0
  %760 = vperm.xlu0 %759, %v578
  %v761 = vpop.permute.xlu0 %760
  %764 = vset.pattern.permute.xlu0 0
  %765 = vperm.xlu0 %764, %v579
  %v766 = vpop.permute.xlu0 %765
  %769 = vset.pattern.permute.xlu0 0
  %770 = vperm.xlu0 %769, %v580
  %v771 = vpop.permute.xlu0 %770
  %774 = vset.pattern.permute.xlu0 0
  %775 = vperm.xlu0 %774, %v581
  %v776 = vpop.permute.xlu0 %775
  %779 = vset.pattern.permute.xlu0 0
  %780 = vperm.xlu0 %779, %v582
  %v781 = vpop.permute.xlu0 %780
  %784 = vset.pattern.permute.xlu0 0
  %785 = vperm.xlu0 %784, %v583
  %v786 = vpop.permute.xlu0 %785
  %789 = vset.pattern.permute.xlu0 0
  %790 = vperm.xlu0 %789, %v584
  %v791 = vpop.permute.xlu0 %790
  %794 = vset.pattern.permute.xlu0 0
  %795 = vperm.xlu0 %794, %v585
  %v796 = vpop.permute.xlu0 %795
  %799 = vset.pattern.permute.xlu0 0
  %800 = vperm.xlu0 %799, %v586
  %v801 = vpop.permute.xlu0 %800
  %804 = vset.pattern.permute.xlu0 0
  %805 = vperm.xlu0 %804, %v587
  %v806 = vpop.permute.xlu0 %805
  %809 = vset.pattern.permute.xlu0 0
  %810 = vperm.xlu0 %809, %v588
  %v811 = vpop.permute.xlu0 %810
  %814 = vset.pattern.permute.xlu0 0
  %815 = vperm.xlu0 %814, %v589
  %v816 = vpop.permute.xlu0 %815
  %819 = vset.pattern.permute.xlu0 0
  %820 = vperm.xlu0 %819, %v590
  %v821 = vpop.permute.xlu0 %820
  %824 = vset.pattern.permute.xlu0 0
  %825 = vperm.xlu0 %824, %v591
  %v826 = vpop.permute.xlu0 %825
  %829 = vset.pattern.permute.xlu0 0
  %830 = vperm.xlu0 %829, %v592
  %v831 = vpop.permute.xlu0 %830
  %834 = vset.pattern.permute.xlu0 0
  %835 = vperm.xlu0 %834, %v593
  %v836 = vpop.permute.xlu0 %835
  %839 = vset.pattern.permute.xlu0 0
  %840 = vperm.xlu0 %839, %v594
  %v841 = vpop.permute.xlu0 %840
  %844 = vset.pattern.permute.xlu0 0
  %845 = vperm.xlu0 %844, %v595
  %v846 = vpop.permute.xlu0 %845
  %849 = vset.pattern.permute.xlu0 0
  %850 = vperm.xlu0 %849, %v596
  %v851 = vpop.permute.xlu0 %850
  %854 = vset.pattern.permute.xlu0 0
  %855 = vperm.xlu0 %854, %v597
  %v856 = vpop.permute.xlu0 %855
  %v858 = vmul.f32 %v17, %v761
  %v859 = vmul.f32 %v18, %v761
  %v860 = vmul.f32 %v19, %v766
  %v861 = vmul.f32 %v20, %v766
  %v862 = vmul.f32 %v21, %v771
  %v863 = vmul.f32 %v22, %v771
  %v864 = vmul.f32 %v23, %v776
  %v865 = vmul.f32 %v24, %v776
  %v866 = vmul.f32 %v25, %v781
  %v867 = vmul.f32 %v26, %v781
  %v868 = vmul.f32 %v27, %v786
  %v869 = vmul.f32 %v28, %v786
  %v870 = vmul.f32 %v29, %v791
  %v871 = vmul.f32 %v30, %v791
  %v872 = vmul.f32 %v31, %v796
  %v873 = vmul.f32 %v32, %v796
  %v874 = vmul.f32 %v33, %v801
  %v875 = vmul.f32 %v34, %v801
  %v876 = vmul.f32 %v35, %v806
  %v877 = vmul.f32 %v36, %v806
  %v878 = vmul.f32 %v37, %v811
  %v879 = vmul.f32 %v38, %v811
  %v880 = vmul.f32 %v39, %v816
  %v881 = vmul.f32 %v40, %v816
  %v882 = vmul.f32 %v41, %v821
  %v883 = vmul.f32 %v42, %v821
  %v884 = vmul.f32 %v43, %v826
  %v885 = vmul.f32 %v44, %v826
  %v886 = vmul.f32 %v45, %v831
  %v887 = vmul.f32 %v46, %v831
  %v888 = vmul.f32 %v47, %v836
  %v889 = vmul.f32 %v48, %v836
  %v890 = vmul.f32 %v49, %v841
  %v891 = vmul.f32 %v50, %v841
  %v892 = vmul.f32 %v51, %v846
  %v893 = vmul.f32 %v52, %v846
  %v894 = vmul.f32 %v53, %v851
  %v895 = vmul.f32 %v54, %v851
  %v896 = vmul.f32 %v55, %v856
  %v897 = vmul.f32 %v56, %v856
  %v898 = vadd.f32 %v718, %v858
  %v899 = vadd.f32 %v719, %v859
  %v900 = vadd.f32 %v720, %v860
  %v901 = vadd.f32 %v721, %v861
  %v902 = vadd.f32 %v722, %v862
  %v903 = vadd.f32 %v723, %v863
  %v904 = vadd.f32 %v724, %v864
  %v905 = vadd.f32 %v725, %v865
  %v906 = vadd.f32 %v726, %v866
  %v907 = vadd.f32 %v727, %v867
  %v908 = vadd.f32 %v728, %v868
  %v909 = vadd.f32 %v729, %v869
  %v910 = vadd.f32 %v730, %v870
  %v911 = vadd.f32 %v731, %v871
  %v912 = vadd.f32 %v732, %v872
  %v913 = vadd.f32 %v733, %v873
  %v914 = vadd.f32 %v734, %v874
  %v915 = vadd.f32 %v735, %v875
  %v916 = vadd.f32 %v736, %v876
  %v917 = vadd.f32 %v737, %v877
  %v918 = vadd.f32 %v738, %v878
  %v919 = vadd.f32 %v739, %v879
  %v920 = vadd.f32 %v740, %v880
  %v921 = vadd.f32 %v741, %v881
  %v922 = vadd.f32 %v742, %v882
  %v923 = vadd.f32 %v743, %v883
  %v924 = vadd.f32 %v744, %v884
  %v925 = vadd.f32 %v745, %v885
  %v926 = vadd.f32 %v746, %v886
  %v927 = vadd.f32 %v747, %v887
  %v928 = vadd.f32 %v748, %v888
  %v929 = vadd.f32 %v749, %v889
  %v930 = vadd.f32 %v750, %v890
  %v931 = vadd.f32 %v751, %v891
  %v932 = vadd.f32 %v752, %v892
  %v933 = vadd.f32 %v753, %v893
  %v934 = vadd.f32 %v754, %v894
  %v935 = vadd.f32 %v755, %v895
  %v936 = vadd.f32 %v756, %v896
  %v937 = vadd.f32 %v757, %v897
  %939 = vset.pattern.permute.xlu0 1
  %940 = vperm.xlu0 %939, %v698
  %v941 = vpop.permute.xlu0 %940
  %944 = vset.pattern.permute.xlu0 1
  %945 = vperm.xlu0 %944, %v699
  %v946 = vpop.permute.xlu0 %945
  %949 = vset.pattern.permute.xlu0 1
  %950 = vperm.xlu0 %949, %v700
  %v951 = vpop.permute.xlu0 %950
  %954 = vset.pattern.permute.xlu0 1
  %955 = vperm.xlu0 %954, %v701
  %v956 = vpop.permute.xlu0 %955
  %959 = vset.pattern.permute.xlu0 1
  %960 = vperm.xlu0 %959, %v702
  %v961 = vpop.permute.xlu0 %960
  %964 = vset.pattern.permute.xlu0 1
  %965 = vperm.xlu0 %964, %v703
  %v966 = vpop.permute.xlu0 %965
  %969 = vset.pattern.permute.xlu0 1
  %970 = vperm.xlu0 %969, %v704
  %v971 = vpop.permute.xlu0 %970
  %974 = vset.pattern.permute.xlu0 1
  %975 = vperm.xlu0 %974, %v705
  %v976 = vpop.permute.xlu0 %975
  %979 = vset.pattern.permute.xlu0 1
  %980 = vperm.xlu0 %979, %v706
  %v981 = vpop.permute.xlu0 %980
  %984 = vset.pattern.permute.xlu0 1
  %985 = vperm.xlu0 %984, %v707
  %v986 = vpop.permute.xlu0 %985
  %989 = vset.pattern.permute.xlu0 1
  %990 = vperm.xlu0 %989, %v708
  %v991 = vpop.permute.xlu0 %990
  %994 = vset.pattern.permute.xlu0 1
  %995 = vperm.xlu0 %994, %v709
  %v996 = vpop.permute.xlu0 %995
  %999 = vset.pattern.permute.xlu0 1
  %1000 = vperm.xlu0 %999, %v710
  %v1001 = vpop.permute.xlu0 %1000
  %1004 = vset.pattern.permute.xlu0 1
  %1005 = vperm.xlu0 %1004, %v711
  %v1006 = vpop.permute.xlu0 %1005
  %1009 = vset.pattern.permute.xlu0 1
  %1010 = vperm.xlu0 %1009, %v712
  %v1011 = vpop.permute.xlu0 %1010
  %1014 = vset.pattern.permute.xlu0 1
  %1015 = vperm.xlu0 %1014, %v713
  %v1016 = vpop.permute.xlu0 %1015
  %1019 = vset.pattern.permute.xlu0 1
  %1020 = vperm.xlu0 %1019, %v714
  %v1021 = vpop.permute.xlu0 %1020
  %1024 = vset.pattern.permute.xlu0 1
  %1025 = vperm.xlu0 %1024, %v715
  %v1026 = vpop.permute.xlu0 %1025
  %1029 = vset.pattern.permute.xlu0 1
  %1030 = vperm.xlu0 %1029, %v716
  %v1031 = vpop.permute.xlu0 %1030
  %1034 = vset.pattern.permute.xlu0 1
  %1035 = vperm.xlu0 %1034, %v717
  %v1036 = vpop.permute.xlu0 %1035
  %v1038 = vadd.f32 %v898, %v941
  %v1039 = vadd.f32 %v899, %v941
  %v1040 = vadd.f32 %v900, %v946
  %v1041 = vadd.f32 %v901, %v946
  %v1042 = vadd.f32 %v902, %v951
  %v1043 = vadd.f32 %v903, %v951
  %v1044 = vadd.f32 %v904, %v956
  %v1045 = vadd.f32 %v905, %v956
  %v1046 = vadd.f32 %v906, %v961
  %v1047 = vadd.f32 %v907, %v961
  %v1048 = vadd.f32 %v908, %v966
  %v1049 = vadd.f32 %v909, %v966
  %v1050 = vadd.f32 %v910, %v971
  %v1051 = vadd.f32 %v911, %v971
  %v1052 = vadd.f32 %v912, %v976
  %v1053 = vadd.f32 %v913, %v976
  %v1054 = vadd.f32 %v914, %v981
  %v1055 = vadd.f32 %v915, %v981
  %v1056 = vadd.f32 %v916, %v986
  %v1057 = vadd.f32 %v917, %v986
  %v1058 = vadd.f32 %v918, %v991
  %v1059 = vadd.f32 %v919, %v991
  %v1060 = vadd.f32 %v920, %v996
  %v1061 = vadd.f32 %v921, %v996
  %v1062 = vadd.f32 %v922, %v1001
  %v1063 = vadd.f32 %v923, %v1001
  %v1064 = vadd.f32 %v924, %v1006
  %v1065 = vadd.f32 %v925, %v1006
  %v1066 = vadd.f32 %v926, %v1011
  %v1067 = vadd.f32 %v927, %v1011
  %v1068 = vadd.f32 %v928, %v1016
  %v1069 = vadd.f32 %v929, %v1016
  %v1070 = vadd.f32 %v930, %v1021
  %v1071 = vadd.f32 %v931, %v1021
  %v1072 = vadd.f32 %v932, %v1026
  %v1073 = vadd.f32 %v933, %v1026
  %v1074 = vadd.f32 %v934, %v1031
  %v1075 = vadd.f32 %v935, %v1031
  %v1076 = vadd.f32 %v936, %v1036
  %v1077 = vadd.f32 %v937, %v1036
  %v1078 = vmax.f32 %v1038, 0.0
  %v1079 = vmax.f32 %v1039, 0.0
  %v1080 = vmax.f32 %v1040, 0.0
  %v1081 = vmax.f32 %v1041, 0.0
  %v1082 = vmax.f32 %v1042, 0.0
  %v1083 = vmax.f32 %v1043, 0.0
  %v1084 = vmax.f32 %v1044, 0.0
  %v1085 = vmax.f32 %v1045, 0.0
  %v1086 = vmax.f32 %v1046, 0.0
  %v1087 = vmax.f32 %v1047, 0.0
  %v1088 = vmax.f32 %v1048, 0.0
  %v1089 = vmax.f32 %v1049, 0.0
  %v1090 = vmax.f32 %v1050, 0.0
  %v1091 = vmax.f32 %v1051, 0.0
  %v1092 = vmax.f32 %v1052, 0.0
  %v1093 = vmax.f32 %v1053, 0.0
  %v1094 = vmax.f32 %v1054, 0.0
  %v1095 = vmax.f32 %v1055, 0.0
  %v1096 = vmax.f32 %v1056, 0.0
  %v1097 = vmax.f32 %v1057, 0.0
  %v1098 = vmax.f32 %v1058, 0.0
  %v1099 = vmax.f32 %v1059, 0.0
  %v1100 = vmax.f32 %v1060, 0.0
  %v1101 = vmax.f32 %v1061, 0.0
  %v1102 = vmax.f32 %v1062, 0.0
  %v1103 = vmax.f32 %v1063, 0.0
  %v1104 = vmax.f32 %v1064, 0.0
  %v1105 = vmax.f32 %v1065, 0.0
  %v1106 = vmax.f32 %v1066, 0.0
  %v1107 = vmax.f32 %v1067, 0.0
  %v1108 = vmax.f32 %v1068, 0.0
  %v1109 = vmax.f32 %v1069, 0.0
  %v1110 = vmax.f32 %v1070, 0.0
  %v1111 = vmax.f32 %v1071, 0.0
  %v1112 = vmax.f32 %v1072, 0.0
  %v1113 = vmax.f32 %v1073, 0.0
  %v1114 = vmax.f32 %v1074, 0.0
  %v1115 = vmax.f32 %v1075, 0.0
  %v1116 = vmax.f32 %v1076, 0.0
  %v1117 = vmax.f32 %v1077, 0.0
  %v1118 = vld [vmem:[%s3] sm:$0xff]
  %v1119 = vld [vmem:[%s3 + $0x8] sm:$0xff]
  %v1120 = vld [vmem:[%s3 + $0x10] sm:$0xff]
  %v1121 = vld [vmem:[%s3 + $0x18] sm:$0xff]
  %v1122 = vld [vmem:[%s3 + $0x20] sm:$0xff]
  %v1123 = vld [vmem:[%s3 + $0x28] sm:$0xff]
  %v1124 = vld [vmem:[%s3 + $0x30] sm:$0xff]
  %v1125 = vld [vmem:[%s3 + $0x38] sm:$0xff]
  %v1126 = vld [vmem:[%s3 + $0x40] sm:$0xff]
  %v1127 = vld [vmem:[%s3 + $0x48] sm:$0xff]
  %v1128 = vld [vmem:[%s3 + $0x50] sm:$0xff]
  %v1129 = vld [vmem:[%s3 + $0x58] sm:$0xff]
  %v1130 = vld [vmem:[%s3 + $0x60] sm:$0xff]
  %v1131 = vld [vmem:[%s3 + $0x68] sm:$0xff]
  %v1132 = vld [vmem:[%s3 + $0x70] sm:$0xff]
  %v1133 = vld [vmem:[%s3 + $0x78] sm:$0xff]
  %v1134 = vld [vmem:[%s3 + $0x80] sm:$0xff]
  %v1135 = vld [vmem:[%s3 + $0x88] sm:$0xff]
  %v1136 = vld [vmem:[%s3 + $0x90] sm:$0xff]
  %v1137 = vld [vmem:[%s3 + $0x98] sm:$0xff]
  %v1138 = vld [vmem:[%s3 + $0xa0] sm:$0xff]
  %v1139 = vld [vmem:[%s3 + $0xa8] sm:$0xff]
  %v1140 = vld [vmem:[%s3 + $0xb0] sm:$0xff]
  %v1141 = vld [vmem:[%s3 + $0xb8] sm:$0xff]
  %v1142 = vld [vmem:[%s3 + $0xc0] sm:$0xff]
  %v1143 = vld [vmem:[%s3 + $0xc8] sm:$0xff]
  %v1144 = vld [vmem:[%s3 + $0xd0] sm:$0xff]
  %v1145 = vld [vmem:[%s3 + $0xd8] sm:$0xff]
  %v1146 = vld [vmem:[%s3 + $0xe0] sm:$0xff]
  %v1147 = vld [vmem:[%s3 + $0xe8] sm:$0xff]
  %v1148 = vld [vmem:[%s3 + $0xf0] sm:$0xff]
  %v1149 = vld [vmem:[%s3 + $0xf8] sm:$0xff]
  %v1150 = vld [vmem:[%s3 + $0x100] sm:$0xff]
  %v1151 = vld [vmem:[%s3 + $0x108] sm:$0xff]
  %v1152 = vld [vmem:[%s3 + $0x110] sm:$0xff]
  %v1153 = vld [vmem:[%s3 + $0x118] sm:$0xff]
  %v1154 = vld [vmem:[%s3 + $0x120] sm:$0xff]
  %v1155 = vld [vmem:[%s3 + $0x128] sm:$0xff]
  %v1156 = vld [vmem:[%s3 + $0x130] sm:$0xff]
  %v1157 = vld [vmem:[%s3 + $0x138] sm:$0xff]
  %vm1158 = vcmask 261120
  %v1160 = vsel %vm1158, %v1119, 0
  %v1163 = vsel %vm1158, %v1121, 0
  %v1166 = vsel %vm1158, %v1123, 0
  %v1169 = vsel %vm1158, %v1125, 0
  %v1172 = vsel %vm1158, %v1127, 0
  %v1175 = vsel %vm1158, %v1129, 0
  %v1178 = vsel %vm1158, %v1131, 0
  %v1181 = vsel %vm1158, %v1133, 0
  %v1184 = vsel %vm1158, %v1135, 0
  %v1187 = vsel %vm1158, %v1137, 0
  %v1190 = vsel %vm1158, %v1139, 0
  %v1193 = vsel %vm1158, %v1141, 0
  %v1196 = vsel %vm1158, %v1143, 0
  %v1199 = vsel %vm1158, %v1145, 0
  %v1202 = vsel %vm1158, %v1147, 0
  %v1205 = vsel %vm1158, %v1149, 0
  %v1208 = vsel %vm1158, %v1151, 0
  %v1211 = vsel %vm1158, %v1153, 0
  %v1214 = vsel %vm1158, %v1155, 0
  %v1217 = vsel %vm1158, %v1157, 0
  %1219 = vmatpush.msra.mxu0 %v1108
  %1220 = vmatpush.msra.mxu0 %v1106
  %1221 = vmatpush.msra.mxu0 %v1104
  %1222 = vmatpush.msra.mxu0 %v1102
  %1223 = vmatpush.msra.mxu0 %v1100
  %1224 = vmatpush.msra.mxu0 %v1098
  %1225 = vmatpush.msra.mxu0 %v1096
  %1226 = vmatpush.msra.mxu0 %v1094
  %1227 = vmatpush.msra.mxu0 %v1092
  %1228 = vmatpush.msra.mxu0 %v1090
  %1229 = vmatpush.msra.mxu0 %v1088
  %1230 = vmatpush.msra.mxu0 %v1086
  %1231 = vmatpush.msra.mxu0 %v1084
  %1232 = vmatpush.msra.mxu0 %v1082
  %1233 = vmatpush.msra.mxu0 %v1080
  %1234 = vmatpush.msra.mxu0 %v1078
  %1235 = vmatmul.f32.gmra.mxu0 %v1118
  %v1236 = vpop.f32.mrf.mxu0
  %v1237 = vadd.f32 0.0, %v1236
  %1238 = vmatmul.f32.gmra.mxu0 %v1120
  %v1239 = vpop.f32.mrf.mxu0
  %v1240 = vadd.f32 0.0, %v1239
  %1241 = vmatmul.f32.gmra.mxu0 %v1122
  %v1242 = vpop.f32.mrf.mxu0
  %v1243 = vadd.f32 0.0, %v1242
  %1244 = vmatmul.f32.gmra.mxu0 %v1124
  %v1245 = vpop.f32.mrf.mxu0
  %v1246 = vadd.f32 0.0, %v1245
  %1247 = vmatmul.f32.gmra.mxu0 %v1126
  %v1248 = vpop.f32.mrf.mxu0
  %v1249 = vadd.f32 0.0, %v1248
  %1250 = vmatmul.f32.gmra.mxu0 %v1128
  %v1251 = vpop.f32.mrf.mxu0
  %v1252 = vadd.f32 0.0, %v1251
  %1253 = vmatmul.f32.gmra.mxu0 %v1130
  %v1254 = vpop.f32.mrf.mxu0
  %v1255 = vadd.f32 0.0, %v1254
  %1256 = vmatmul.f32.gmra.mxu0 %v1132
  %v1257 = vpop.f32.mrf.mxu0
  %v1258 = vadd.f32 0.0, %v1257
  %1259 = vmatmul.f32.gmra.mxu0 %v1134
  %v1260 = vpop.f32.mrf.mxu0
  %v1261 = vadd.f32 0.0, %v1260
  %1262 = vmatmul.f32.gmra.mxu0 %v1136
  %v1263 = vpop.f32.mrf.mxu0
  %v1264 = vadd.f32 0.0, %v1263
  %1265 = vmatmul.f32.gmra.mxu0 %v1138
  %v1266 = vpop.f32.mrf.mxu0
  %v1267 = vadd.f32 0.0, %v1266
  %1268 = vmatmul.f32.gmra.mxu0 %v1140
  %v1269 = vpop.f32.mrf.mxu0
  %v1270 = vadd.f32 0.0, %v1269
  %1271 = vmatmul.f32.gmra.mxu0 %v1142
  %v1272 = vpop.f32.mrf.mxu0
  %v1273 = vadd.f32 0.0, %v1272
  %1274 = vmatmul.f32.gmra.mxu0 %v1144
  %v1275 = vpop.f32.mrf.mxu0
  %v1276 = vadd.f32 0.0, %v1275
  %1277 = vmatmul.f32.gmra.mxu0 %v1146
  %v1278 = vpop.f32.mrf.mxu0
  %v1279 = vadd.f32 0.0, %v1278
  %1280 = vmatmul.f32.gmra.mxu0 %v1148
  %v1281 = vpop.f32.mrf.mxu0
  %v1282 = vadd.f32 0.0, %v1281
  %1283 = vmatmul.f32.gmra.mxu0 %v1150
  %v1284 = vpop.f32.mrf.mxu0
  %v1285 = vadd.f32 0.0, %v1284
  %1286 = vmatmul.f32.gmra.mxu0 %v1152
  %v1287 = vpop.f32.mrf.mxu0
  %v1288 = vadd.f32 0.0, %v1287
  %1289 = vmatmul.f32.gmra.mxu0 %v1154
  %v1290 = vpop.f32.mrf.mxu0
  %v1291 = vadd.f32 0.0, %v1290
  %1292 = vmatmul.f32.gmra.mxu0 %v1156
  %v1293 = vpop.f32.mrf.mxu0
  %v1294 = vadd.f32 0.0, %v1293
  %1295 = vdwg.mxu0
  %1296 = vmatpush.msra.mxu0 0.0
  %1297 = vmatpush.msra.mxu0 0.0
  %1298 = vmatpush.msra.mxu0 0.0
  %1299 = vmatpush.msra.mxu0 0.0
  %1300 = vmatpush.msra.mxu0 0.0
  %1301 = vmatpush.msra.mxu0 0.0
  %1302 = vmatpush.msra.mxu0 0.0
  %1303 = vmatpush.msra.mxu0 0.0
  %1304 = vmatpush.msra.mxu0 0.0
  %1305 = vmatpush.msra.mxu0 0.0
  %1306 = vmatpush.msra.mxu0 0.0
  %1307 = vmatpush.msra.mxu0 0.0
  %1308 = vmatpush.msra.mxu0 %v1116
  %1309 = vmatpush.msra.mxu0 %v1114
  %1310 = vmatpush.msra.mxu0 %v1112
  %1311 = vmatpush.msra.mxu0 %v1110
  %1312 = vmatmul.f32.gmra.mxu0 %v1160
  %v1313 = vpop.f32.mrf.mxu0
  %v1314 = vadd.f32 %v1237, %v1313
  %1315 = vmatmul.f32.gmra.mxu0 %v1163
  %v1316 = vpop.f32.mrf.mxu0
  %v1317 = vadd.f32 %v1240, %v1316
  %1318 = vmatmul.f32.gmra.mxu0 %v1166
  %v1319 = vpop.f32.mrf.mxu0
  %v1320 = vadd.f32 %v1243, %v1319
  %1321 = vmatmul.f32.gmra.mxu0 %v1169
  %v1322 = vpop.f32.mrf.mxu0
  %v1323 = vadd.f32 %v1246, %v1322
  %1324 = vmatmul.f32.gmra.mxu0 %v1172
  %v1325 = vpop.f32.mrf.mxu0
  %v1326 = vadd.f32 %v1249, %v1325
  %1327 = vmatmul.f32.gmra.mxu0 %v1175
  %v1328 = vpop.f32.mrf.mxu0
  %v1329 = vadd.f32 %v1252, %v1328
  %1330 = vmatmul.f32.gmra.mxu0 %v1178
  %v1331 = vpop.f32.mrf.mxu0
  %v1332 = vadd.f32 %v1255, %v1331
  %1333 = vmatmul.f32.gmra.mxu0 %v1181
  %v1334 = vpop.f32.mrf.mxu0
  %v1335 = vadd.f32 %v1258, %v1334
  %1336 = vmatmul.f32.gmra.mxu0 %v1184
  %v1337 = vpop.f32.mrf.mxu0
  %v1338 = vadd.f32 %v1261, %v1337
  %1339 = vmatmul.f32.gmra.mxu0 %v1187
  %v1340 = vpop.f32.mrf.mxu0
  %v1341 = vadd.f32 %v1264, %v1340
  %1342 = vmatmul.f32.gmra.mxu0 %v1190
  %v1343 = vpop.f32.mrf.mxu0
  %v1344 = vadd.f32 %v1267, %v1343
  %1345 = vmatmul.f32.gmra.mxu0 %v1193
  %v1346 = vpop.f32.mrf.mxu0
  %v1347 = vadd.f32 %v1270, %v1346
  %1348 = vmatmul.f32.gmra.mxu0 %v1196
  %v1349 = vpop.f32.mrf.mxu0
  %v1350 = vadd.f32 %v1273, %v1349
  %1351 = vmatmul.f32.gmra.mxu0 %v1199
  %v1352 = vpop.f32.mrf.mxu0
  %v1353 = vadd.f32 %v1276, %v1352
  %1354 = vmatmul.f32.gmra.mxu0 %v1202
  %v1355 = vpop.f32.mrf.mxu0
  %v1356 = vadd.f32 %v1279, %v1355
  %1357 = vmatmul.f32.gmra.mxu0 %v1205
  %v1358 = vpop.f32.mrf.mxu0
  %v1359 = vadd.f32 %v1282, %v1358
  %1360 = vmatmul.f32.gmra.mxu0 %v1208
  %v1361 = vpop.f32.mrf.mxu0
  %v1362 = vadd.f32 %v1285, %v1361
  %1363 = vmatmul.f32.gmra.mxu0 %v1211
  %v1364 = vpop.f32.mrf.mxu0
  %v1365 = vadd.f32 %v1288, %v1364
  %1366 = vmatmul.f32.gmra.mxu0 %v1214
  %v1367 = vpop.f32.mrf.mxu0
  %v1368 = vadd.f32 %v1291, %v1367
  %1369 = vmatmul.f32.gmra.mxu0 %v1217
  %v1370 = vpop.f32.mrf.mxu0
  %v1371 = vadd.f32 %v1294, %v1370
  %1372 = vdwg.mxu0
  %1373 = vmatpush.msra.mxu0 %v1109
  %1374 = vmatpush.msra.mxu0 %v1107
  %1375 = vmatpush.msra.mxu0 %v1105
  %1376 = vmatpush.msra.mxu0 %v1103
  %1377 = vmatpush.msra.mxu0 %v1101
  %1378 = vmatpush.msra.mxu0 %v1099
  %1379 = vmatpush.msra.mxu0 %v1097
  %1380 = vmatpush.msra.mxu0 %v1095
  %1381 = vmatpush.msra.mxu0 %v1093
  %1382 = vmatpush.msra.mxu0 %v1091
  %1383 = vmatpush.msra.mxu0 %v1089
  %1384 = vmatpush.msra.mxu0 %v1087
  %1385 = vmatpush.msra.mxu0 %v1085
  %1386 = vmatpush.msra.mxu0 %v1083
  %1387 = vmatpush.msra.mxu0 %v1081
  %1388 = vmatpush.msra.mxu0 %v1079
  %1389 = vmatmul.f32.gmra.mxu0 %v1118
  %v1390 = vpop.f32.mrf.mxu0
  %v1391 = vadd.f32 0.0, %v1390
  %1392 = vmatmul.f32.gmra.mxu0 %v1120
  %v1393 = vpop.f32.mrf.mxu0
  %v1394 = vadd.f32 0.0, %v1393
  %1395 = vmatmul.f32.gmra.mxu0 %v1122
  %v1396 = vpop.f32.mrf.mxu0
  %v1397 = vadd.f32 0.0, %v1396
  %1398 = vmatmul.f32.gmra.mxu0 %v1124
  %v1399 = vpop.f32.mrf.mxu0
  %v1400 = vadd.f32 0.0, %v1399
  %1401 = vmatmul.f32.gmra.mxu0 %v1126
  %v1402 = vpop.f32.mrf.mxu0
  %v1403 = vadd.f32 0.0, %v1402
  %1404 = vmatmul.f32.gmra.mxu0 %v1128
  %v1405 = vpop.f32.mrf.mxu0
  %v1406 = vadd.f32 0.0, %v1405
  %1407 = vmatmul.f32.gmra.mxu0 %v1130
  %v1408 = vpop.f32.mrf.mxu0
  %v1409 = vadd.f32 0.0, %v1408
  %1410 = vmatmul.f32.gmra.mxu0 %v1132
  %v1411 = vpop.f32.mrf.mxu0
  %v1412 = vadd.f32 0.0, %v1411
  %1413 = vmatmul.f32.gmra.mxu0 %v1134
  %v1414 = vpop.f32.mrf.mxu0
  %v1415 = vadd.f32 0.0, %v1414
  %1416 = vmatmul.f32.gmra.mxu0 %v1136
  %v1417 = vpop.f32.mrf.mxu0
  %v1418 = vadd.f32 0.0, %v1417
  %1419 = vmatmul.f32.gmra.mxu0 %v1138
  %v1420 = vpop.f32.mrf.mxu0
  %v1421 = vadd.f32 0.0, %v1420
  %1422 = vmatmul.f32.gmra.mxu0 %v1140
  %v1423 = vpop.f32.mrf.mxu0
  %v1424 = vadd.f32 0.0, %v1423
  %1425 = vmatmul.f32.gmra.mxu0 %v1142
  %v1426 = vpop.f32.mrf.mxu0
  %v1427 = vadd.f32 0.0, %v1426
  %1428 = vmatmul.f32.gmra.mxu0 %v1144
  %v1429 = vpop.f32.mrf.mxu0
  %v1430 = vadd.f32 0.0, %v1429
  %1431 = vmatmul.f32.gmra.mxu0 %v1146
  %v1432 = vpop.f32.mrf.mxu0
  %v1433 = vadd.f32 0.0, %v1432
  %1434 = vmatmul.f32.gmra.mxu0 %v1148
  %v1435 = vpop.f32.mrf.mxu0
  %v1436 = vadd.f32 0.0, %v1435
  %1437 = vmatmul.f32.gmra.mxu0 %v1150
  %v1438 = vpop.f32.mrf.mxu0
  %v1439 = vadd.f32 0.0, %v1438
  %1440 = vmatmul.f32.gmra.mxu0 %v1152
  %v1441 = vpop.f32.mrf.mxu0
  %v1442 = vadd.f32 0.0, %v1441
  %1443 = vmatmul.f32.gmra.mxu0 %v1154
  %v1444 = vpop.f32.mrf.mxu0
  %v1445 = vadd.f32 0.0, %v1444
  %1446 = vmatmul.f32.gmra.mxu0 %v1156
  %v1447 = vpop.f32.mrf.mxu0
  %v1448 = vadd.f32 0.0, %v1447
  %1449 = vdwg.mxu0
  %1450 = vmatpush.msra.mxu0 0.0
  %1451 = vmatpush.msra.mxu0 0.0
  %1452 = vmatpush.msra.mxu0 0.0
  %1453 = vmatpush.msra.mxu0 0.0
  %1454 = vmatpush.msra.mxu0 0.0
  %1455 = vmatpush.msra.mxu0 0.0
  %1456 = vmatpush.msra.mxu0 0.0
  %1457 = vmatpush.msra.mxu0 0.0
  %1458 = vmatpush.msra.mxu0 0.0
  %1459 = vmatpush.msra.mxu0 0.0
  %1460 = vmatpush.msra.mxu0 0.0
  %1461 = vmatpush.msra.mxu0 0.0
  %1462 = vmatpush.msra.mxu0 %v1117
  %1463 = vmatpush.msra.mxu0 %v1115
  %1464 = vmatpush.msra.mxu0 %v1113
  %1465 = vmatpush.msra.mxu0 %v1111
  %1466 = vmatmul.f32.gmra.mxu0 %v1160
  %v1467 = vpop.f32.mrf.mxu0
  %v1468 = vadd.f32 %v1391, %v1467
  %1469 = vmatmul.f32.gmra.mxu0 %v1163
  %v1470 = vpop.f32.mrf.mxu0
  %v1471 = vadd.f32 %v1394, %v1470
  %1472 = vmatmul.f32.gmra.mxu0 %v1166
  %v1473 = vpop.f32.mrf.mxu0
  %v1474 = vadd.f32 %v1397, %v1473
  %1475 = vmatmul.f32.gmra.mxu0 %v1169
  %v1476 = vpop.f32.mrf.mxu0
  %v1477 = vadd.f32 %v1400, %v1476
  %1478 = vmatmul.f32.gmra.mxu0 %v1172
  %v1479 = vpop.f32.mrf.mxu0
  %v1480 = vadd.f32 %v1403, %v1479
  %1481 = vmatmul.f32.gmra.mxu0 %v1175
  %v1482 = vpop.f32.mrf.mxu0
  %v1483 = vadd.f32 %v1406, %v1482
  %1484 = vmatmul.f32.gmra.mxu0 %v1178
  %v1485 = vpop.f32.mrf.mxu0
  %v1486 = vadd.f32 %v1409, %v1485
  %1487 = vmatmul.f32.gmra.mxu0 %v1181
  %v1488 = vpop.f32.mrf.mxu0
  %v1489 = vadd.f32 %v1412, %v1488
  %1490 = vmatmul.f32.gmra.mxu0 %v1184
  %v1491 = vpop.f32.mrf.mxu0
  %v1492 = vadd.f32 %v1415, %v1491
  %1493 = vmatmul.f32.gmra.mxu0 %v1187
  %v1494 = vpop.f32.mrf.mxu0
  %v1495 = vadd.f32 %v1418, %v1494
  %1496 = vmatmul.f32.gmra.mxu0 %v1190
  %v1497 = vpop.f32.mrf.mxu0
  %v1498 = vadd.f32 %v1421, %v1497
  %1499 = vmatmul.f32.gmra.mxu0 %v1193
  %v1500 = vpop.f32.mrf.mxu0
  %v1501 = vadd.f32 %v1424, %v1500
  %1502 = vmatmul.f32.gmra.mxu0 %v1196
  %v1503 = vpop.f32.mrf.mxu0
  %v1504 = vadd.f32 %v1427, %v1503
  %1505 = vmatmul.f32.gmra.mxu0 %v1199
  %v1506 = vpop.f32.mrf.mxu0
  %v1507 = vadd.f32 %v1430, %v1506
  %1508 = vmatmul.f32.gmra.mxu0 %v1202
  %v1509 = vpop.f32.mrf.mxu0
  %v1510 = vadd.f32 %v1433, %v1509
  %1511 = vmatmul.f32.gmra.mxu0 %v1205
  %v1512 = vpop.f32.mrf.mxu0
  %v1513 = vadd.f32 %v1436, %v1512
  %1514 = vmatmul.f32.gmra.mxu0 %v1208
  %v1515 = vpop.f32.mrf.mxu0
  %v1516 = vadd.f32 %v1439, %v1515
  %1517 = vmatmul.f32.gmra.mxu0 %v1211
  %v1518 = vpop.f32.mrf.mxu0
  %v1519 = vadd.f32 %v1442, %v1518
  %1520 = vmatmul.f32.gmra.mxu0 %v1214
  %v1521 = vpop.f32.mrf.mxu0
  %v1522 = vadd.f32 %v1445, %v1521
  %1523 = vmatmul.f32.gmra.mxu0 %v1217
  %v1524 = vpop.f32.mrf.mxu0
  %v1525 = vadd.f32 %v1448, %v1524
  %1526 = vdwg.mxu0
  %1527 = vst [vmem:[%s4] sm:$0xff] %v1314
  %1528 = vst.msk [vmem:[%s4 + $0x8] sm:$0xff] %vm57, %v1468
  %1529 = vst [vmem:[%s4 + $0x10] sm:$0xff] %v1317
  %1530 = vst.msk [vmem:[%s4 + $0x18] sm:$0xff] %vm57, %v1471
  %1531 = vst [vmem:[%s4 + $0x20] sm:$0xff] %v1320
  %1532 = vst.msk [vmem:[%s4 + $0x28] sm:$0xff] %vm57, %v1474
  %1533 = vst [vmem:[%s4 + $0x30] sm:$0xff] %v1323
  %1534 = vst.msk [vmem:[%s4 + $0x38] sm:$0xff] %vm57, %v1477
  %1535 = vst [vmem:[%s4 + $0x40] sm:$0xff] %v1326
  %1536 = vst.msk [vmem:[%s4 + $0x48] sm:$0xff] %vm57, %v1480
  %1537 = vst [vmem:[%s4 + $0x50] sm:$0xff] %v1329
  %1538 = vst.msk [vmem:[%s4 + $0x58] sm:$0xff] %vm57, %v1483
  %1539 = vst [vmem:[%s4 + $0x60] sm:$0xff] %v1332
  %1540 = vst.msk [vmem:[%s4 + $0x68] sm:$0xff] %vm57, %v1486
  %1541 = vst [vmem:[%s4 + $0x70] sm:$0xff] %v1335
  %1542 = vst.msk [vmem:[%s4 + $0x78] sm:$0xff] %vm57, %v1489
  %1543 = vst [vmem:[%s4 + $0x80] sm:$0xff] %v1338
  %1544 = vst.msk [vmem:[%s4 + $0x88] sm:$0xff] %vm57, %v1492
  %1545 = vst [vmem:[%s4 + $0x90] sm:$0xff] %v1341
  %1546 = vst.msk [vmem:[%s4 + $0x98] sm:$0xff] %vm57, %v1495
  %1547 = vst [vmem:[%s4 + $0xa0] sm:$0xff] %v1344
  %1548 = vst.msk [vmem:[%s4 + $0xa8] sm:$0xff] %vm57, %v1498
  %1549 = vst [vmem:[%s4 + $0xb0] sm:$0xff] %v1347
  %1550 = vst.msk [vmem:[%s4 + $0xb8] sm:$0xff] %vm57, %v1501
  %1551 = vst [vmem:[%s4 + $0xc0] sm:$0xff] %v1350
  %1552 = vst.msk [vmem:[%s4 + $0xc8] sm:$0xff] %vm57, %v1504
  %1553 = vst [vmem:[%s4 + $0xd0] sm:$0xff] %v1353
  %1554 = vst.msk [vmem:[%s4 + $0xd8] sm:$0xff] %vm57, %v1507
  %1555 = vst [vmem:[%s4 + $0xe0] sm:$0xff] %v1356
  %1556 = vst.msk [vmem:[%s4 + $0xe8] sm:$0xff] %vm57, %v1510
  %1557 = vst [vmem:[%s4 + $0xf0] sm:$0xff] %v1359
  %1558 = vst.msk [vmem:[%s4 + $0xf8] sm:$0xff] %vm57, %v1513
  %1559 = vst [vmem:[%s4 + $0x100] sm:$0xff] %v1362
  %1560 = vst.msk [vmem:[%s4 + $0x108] sm:$0xff] %vm57, %v1516
  %1561 = vst [vmem:[%s4 + $0x110] sm:$0xff] %v1365
  %1562 = vst.msk [vmem:[%s4 + $0x118] sm:$0xff] %vm57, %v1519
  %1563 = vst [vmem:[%s4 + $0x120] sm:$0xff] %v1368
  %1564 = vst.msk [vmem:[%s4 + $0x128] sm:$0xff] %vm57, %v1522
  %1565 = vst [vmem:[%s4 + $0x130] sm:$0xff] %v1371
  %1566 = vst.msk [vmem:[%s4 + $0x138] sm:$0xff] %vm57, %v1525
  // Predicated region
  $region18: #{fused_forward.1} parent=0 // pred_check
    _
  $region19: #{fused_forward.1} parent=0 // pred_check_branch
    %1568 = sbr.rel (0) target = $region21
  $region20: #{fused_forward.1} parent=0 // pred_region
    _
  $region21: #{fused_forward.1} parent=0 // pred_fallthru
    _
  // Predicated region
  $region22: #{fused_forward.1} parent=0 // pred_check
    _
  $region23: #{fused_forward.1} parent=0 // pred_check_branch
    %1570 = sbr.rel (0) target = $region25
  $region24: #{fused_forward.1} parent=0 // pred_region
    _
  $region25: #{fused_forward.1} parent=0 // pred_fallthru
    _

</llo_original>
